<compile_context>
chip_gen: v5e
topology: v5e:2x2
jax: 0.10.0
libtpu: 0.0.40
codegen_flags: <defaults>
</compile_context>

<pallas_src>
import jax
import jax.numpy as jnp
from jax.experimental import pallas as pl
from jax.experimental.pallas import tpu as pltpu


def _round_up(x: int, m: int) -> int:
    return ((x + m - 1) // m) * m


def _vmem_capacity_bytes(default=64 * 1024 * 1024) -> int:
    """Physical VMEM per TensorCore; conservative 64 MiB (v7x-sized) fallback."""
    try:
        info = pltpu.get_tpu_info()
        cap = getattr(info, "vmem_capacity_bytes", None)
        if cap:
            return int(cap)
    except Exception:
        pass
    return default


def _bert_intermediate_kernel(x_ref, w_ref, b_ref, o_ref):
    # x_ref: [tm, H] (input dtype, e.g. f32)   w_ref: [H, tn] (bf16, resident)
    # b_ref: [1, tn] (f32, resident)           o_ref: [tm, tn]
    x = x_ref[...].astype(w_ref.dtype)                  # cast in VMEM, not via HBM
    acc = jnp.dot(x, w_ref[...], preferred_element_type=jnp.float32)
    acc = acc + b_ref[...]                              # bias broadcast (f32)
    o_ref[...] = jnp.maximum(acc, 0.0).astype(o_ref.dtype)


def bert_intermediate(hidden_states, weight, bias, *, tm=None,
                      compute_dtype=jnp.bfloat16, out_dtype=None):
    """ReLU(hidden_states @ weight + bias).

    hidden_states: [B, S, H] (any float dtype; cast to bf16 inside the kernel)
    weight:        [H, I]    (preferably already stored in bf16)
    bias:          [I]
    Returns [B, S, I] in `out_dtype` (default: compute_dtype, i.e. bf16).
    """
    B, S, H = hidden_states.shape
    Hw, I = weight.shape
    assert H == Hw and bias.shape == (I,)

    if out_dtype is None:
        out_dtype = compute_dtype            # bf16 out: halves dominant HBM stream
    x_itemsize = jnp.dtype(hidden_states.dtype).itemsize
    w_itemsize = jnp.dtype(compute_dtype).itemsize
    out_itemsize = jnp.dtype(out_dtype).itemsize

    M = B * S
    M_pad = _round_up(M, 8)                  # sublane granularity only

    x2d = hidden_states.reshape(M, H)        # free (contiguous); NO dtype cast here
    if M_pad != M:
        x2d = jnp.pad(x2d, ((0, M_pad - M), (0, 0)))
    # Weight should already be stored in compute_dtype; cast is a no-op then.
    w = weight if weight.dtype == compute_dtype else weight.astype(compute_dtype)
    b2d = bias.reshape(1, I).astype(jnp.float32)

    vmem_cap = _vmem_capacity_bytes()
    vmem_budget = int(0.6 * vmem_cap)        # leave pipeline / scratch headroom

    # Row tile: big enough to amortize the ~0.35us per-grid-step overhead, small
    # enough that the M grid has >= ~4 steps (>=2 per TensorCore on dual-TC v7x).
    tm_cap = 1024 if vmem_cap >= 100 * 1024 * 1024 else 512
    if tm is None:
        tm = tm_cap
    tm_eff = max(8, min(tm, tm_cap, _round_up(pl.cdiv(M_pad, 4), 8)))

    def footprint(tm_, tn_):
        return (2 * tm_ * H * x_itemsize        # activation tiles (double buffered)
                + tm_ * H * w_itemsize          # in-kernel bf16 copy of the x tile
                + 2 * H * tn_ * w_itemsize      # weight block (worst case 2 buffers)
                + 2 * tn_ * 4                   # bias block
                + 2 * tm_ * tn_ * out_itemsize  # output tiles (double buffered)
                + tm_ * tn_ * 4)                # f32 accumulator

    # Prefer a fully resident weight (tn == I); split the intermediate axis only
    # when it would not fit (e.g. very large layers on v7x's 64 MiB VMEM).
    tn = I
    while footprint(tm_eff, tn) > vmem_budget and tn % 256 == 0 and tn // 2 >= 128:
        tn //= 2
    while footprint(tm_eff, tn) > vmem_budget and tm_eff > 8:
        tm_eff = max(8, _round_up(tm_eff // 2, 8))

    # N outermost: the weight block index is constant over the inner M loop, so
    # each weight block is DMA'd from HBM exactly once.
    grid = (pl.cdiv(I, tn), pl.cdiv(M_pad, tm_eff))

    # Advisory cost estimate for XLA's scheduler.
    bytes_accessed = (grid[0] * M_pad * H * x_itemsize   # x re-read once per N tile
                      + H * I * w_itemsize               # weight read once
                      + I * 4                            # bias
                      + M_pad * I * out_itemsize)        # output written once
    cost = pl.CostEstimate(flops=2 * M_pad * H * I, transcendentals=0,
                           bytes_accessed=int(bytes_accessed))

    vmem_limit = int(min(int(0.9 * vmem_cap),
                         max(32 * 1024 * 1024, 2 * footprint(tm_eff, tn))))

    def run(weight_pipeline_mode):
        w_kwargs = ({} if weight_pipeline_mode is None
                    else dict(pipeline_mode=weight_pipeline_mode))
        return pl.pallas_call(
            _bert_intermediate_kernel,
            out_shape=jax.ShapeDtypeStruct((M_pad, I), out_dtype),
            grid_spec=pltpu.PrefetchScalarGridSpec(
                num_scalar_prefetch=0,
                grid=grid,
                in_specs=[
                    pl.BlockSpec((tm_eff, H), lambda j, i: (i, 0)),          # x rows
                    pl.BlockSpec((H, tn), lambda j, i: (0, j), **w_kwargs),  # weight
                    pl.BlockSpec((1, tn), lambda j, i: (0, j), **w_kwargs),  # bias
                ],
                out_specs=pl.BlockSpec((tm_eff, tn), lambda j, i: (i, j)),
            ),
            compiler_params=pltpu.CompilerParams(
                dimension_semantics=("parallel", "parallel"),  # shards across TCs
                vmem_limit_bytes=vmem_limit,
            ),
            cost_estimate=cost,
        )(x2d, w, b2d)

    try:
        # Constant-index operands don't need a second pipeline buffer.
        out2d = run(pl.Buffered(1))
    except Exception:
        # TODO(synk): pl.Buffered(1) not accepted by this jax build; fall back to
        # default double buffering (costs only H*tn*2 extra VMEM bytes).
        out2d = run(None)

    if M_pad != M:
        out2d = out2d[:M]
    return out2d.reshape(B, S, I)


def reference(hidden_states, weight, bias):
    y = jnp.einsum("bsh,hi->bsi", hidden_states, weight,
                   preferred_element_type=jnp.float32) + bias
    return jnp.maximum(y, 0.0)


if __name__ == "__main__":
    # Small "config": hidden_size=128, intermediate_size=256.
    batch, seq, hidden_size, intermediate_size = 2, 8, 128, 256

    key = jax.random.PRNGKey(0)
    k_x, k_w, k_b = jax.random.split(key, 3)

    x = jax.random.normal(k_x, (batch, seq, hidden_size), dtype=jnp.float32)
    # Deterministic synthetic "nn.Linear" parameters; weight stored as [H, I]
    # (transposed vs. PyTorch's [I, H] convention).
    w_f32 = jax.random.normal(k_w, (hidden_size, intermediate_size),
                              dtype=jnp.float32) * 0.02
    b = jax.random.normal(k_b, (intermediate_size,), dtype=jnp.float32) * 0.02

    # Per the perf review: store the dense weight in bf16 once, outside the
    # per-call path, so no per-forward f32->bf16 cast pass over HBM is needed.
    w = w_f32.astype(jnp.bfloat16)

    out = bert_intermediate(x, w, b)
    out = jax.block_until_ready(out)

    ref = reference(x, w_f32, b)
    assert out.shape == (batch, seq, intermediate_size)
    # bf16 MXU operands / bf16 output with f32 accumulation -> relaxed tolerance
    # vs. the f32 reference.
    assert jnp.allclose(out.astype(jnp.float32), ref, atol=2e-2, rtol=2e-2), \
        "mismatch vs reference"

    print("KERNEL_OK")
</pallas_src>

<mosaic_0001>
module attributes {stable_mosaic.version = 11 : i64} {
  func.func @_bert_intermediate_kernel(%arg0: i32, %arg1: i32, %arg2: memref<8x128xf32, #tpu.memory_space<vmem>>, %arg3: memref<128x256xbf16, #tpu.memory_space<vmem>>, %arg4: memref<1x256xf32, #tpu.memory_space<vmem>>, %arg5: memref<8x256xbf16, #tpu.memory_space<vmem>>) attributes {dimension_semantics = [#tpu.dimension_semantics<parallel>, #tpu.dimension_semantics<parallel>], iteration_bounds = array<i64: 1, 2>, scalar_prefetch = 0 : i64, scratch_operands = 0 : i64, tpu.core_type = #tpu.core_type<tc>, window_params = [{transform_indices = @transform_0, window_bounds = array<i64: 8, 128>}, {pipeline_mode = #tpu.pipeline_mode<synchronous>, transform_indices = @transform_1, window_bounds = array<i64: 128, 256>}, {pipeline_mode = #tpu.pipeline_mode<synchronous>, transform_indices = @transform_2, window_bounds = array<i64: 1, 256>}, {transform_indices = @transform_3, window_bounds = array<i64: 8, 256>}]} {
    %c0 = arith.constant 0 : index
    %c0_0 = arith.constant 0 : index
    %0 = vector.load %arg2[%c0, %c0_0] : memref<8x128xf32, #tpu.memory_space<vmem>>, vector<8x128xf32>
    %1 = arith.truncf %0 : vector<8x128xf32> to vector<8x128xbf16>
    %c0_1 = arith.constant 0 : index
    %c0_2 = arith.constant 0 : index
    %2 = vector.load %arg3[%c0_1, %c0_2] : memref<128x256xbf16, #tpu.memory_space<vmem>>, vector<128x256xbf16>
    %cst = arith.constant dense<0.000000e+00> : vector<8x256xf32>
    %3 = tpu.matmul %1, %2, %cst {dimension_numbers = #tpu.dot_dimension_numbers<[1], [0], [0], [1], [0, 0, 1, 1], [], []>} : vector<8x128xbf16>, vector<128x256xbf16>, vector<8x256xf32> -> vector<8x256xf32>
    %c0_3 = arith.constant 0 : index
    %c0_4 = arith.constant 0 : index
    %4 = vector.load %arg4[%c0_3, %c0_4] : memref<1x256xf32, #tpu.memory_space<vmem>>, vector<1x256xf32>
    %5 = vector.broadcast %4 : vector<1x256xf32> to vector<8x256xf32>
    %6 = arith.addf %3, %5 : vector<8x256xf32>
    %cst_5 = arith.constant 0.000000e+00 : f32
    %7 = vector.broadcast %cst_5 : f32 to vector<8x256xf32>
    %8 = arith.maximumf %6, %7 : vector<8x256xf32>
    %9 = arith.truncf %8 : vector<8x256xf32> to vector<8x256xbf16>
    %c0_6 = arith.constant 0 : index
    %c0_7 = arith.constant 0 : index
    %10 = vector.load %arg5[%c0_6, %c0_7] : memref<8x256xbf16, #tpu.memory_space<vmem>>, vector<8x256xbf16>
    tpu.vector_store %arg5[%c0_6, %c0_7], %9 {strides = array<i32>} : memref<8x256xbf16, #tpu.memory_space<vmem>>, vector<8x256xbf16>,
    return
  }
  func.func @transform_0(%arg0: i32, %arg1: i32) -> (i32, i32) {
    %c0_i32 = arith.constant 0 : i32
    %c0_i32_0 = arith.constant 0 : i32
    return %arg1, %c0_i32 : i32, i32
  }
  func.func @transform_1(%arg0: i32, %arg1: i32) -> (i32, i32) {
    %c0_i32 = arith.constant 0 : i32
    %c0_i32_0 = arith.constant 0 : i32
    return %c0_i32, %arg0 : i32, i32
  }
  func.func @transform_2(%arg0: i32, %arg1: i32) -> (i32, i32) {
    %c0_i32 = arith.constant 0 : i32
    %c0_i32_0 = arith.constant 0 : i32
    return %c0_i32, %arg0 : i32, i32
  }
  func.func @transform_3(%arg0: i32, %arg1: i32) -> (i32, i32) {
    %c0_i32 = arith.constant 0 : i32
    return %arg1, %arg0 : i32, i32
  }
}

module attributes {stable_mosaic.version = 11 : i64} {
  func.func @_bert_intermediate_kernel(%arg0: i32, %arg1: i32, %arg2: memref<8x128xf32, #tpu.memory_space<vmem>>, %arg3: memref<128x256xbf16, #tpu.memory_space<vmem>>, %arg4: memref<1x256xf32, #tpu.memory_space<vmem>>, %arg5: memref<8x256xbf16, #tpu.memory_space<vmem>>) attributes {dimension_semantics = [#tpu.dimension_semantics<parallel>, #tpu.dimension_semantics<parallel>], iteration_bounds = array<i64: 1, 2>, scalar_prefetch = 0 : i64, scratch_operands = 0 : i64, tpu.core_type = #tpu.core_type<tc>, window_params = [{transform_indices = @transform_0, window_bounds = array<i64: 8, 128>}, {transform_indices = @transform_1, window_bounds = array<i64: 128, 256>}, {transform_indices = @transform_2, window_bounds = array<i64: 1, 256>}, {transform_indices = @transform_3, window_bounds = array<i64: 8, 256>}]} {
    %c0 = arith.constant 0 : index
    %c0_0 = arith.constant 0 : index
    %0 = vector.load %arg2[%c0, %c0_0] : memref<8x128xf32, #tpu.memory_space<vmem>>, vector<8x128xf32>
    %1 = arith.truncf %0 : vector<8x128xf32> to vector<8x128xbf16>
    %c0_1 = arith.constant 0 : index
    %c0_2 = arith.constant 0 : index
    %2 = vector.load %arg3[%c0_1, %c0_2] : memref<128x256xbf16, #tpu.memory_space<vmem>>, vector<128x256xbf16>
    %cst = arith.constant dense<0.000000e+00> : vector<8x256xf32>
    %3 = tpu.matmul %1, %2, %cst {dimension_numbers = #tpu.dot_dimension_numbers<[1], [0], [0], [1], [0, 0, 1, 1], [], []>} : vector<8x128xbf16>, vector<128x256xbf16>, vector<8x256xf32> -> vector<8x256xf32>
    %c0_3 = arith.constant 0 : index
    %c0_4 = arith.constant 0 : index
    %4 = vector.load %arg4[%c0_3, %c0_4] : memref<1x256xf32, #tpu.memory_space<vmem>>, vector<1x256xf32>
    %5 = vector.broadcast %4 : vector<1x256xf32> to vector<8x256xf32>
    %6 = arith.addf %3, %5 : vector<8x256xf32>
    %cst_5 = arith.constant 0.000000e+00 : f32
    %7 = vector.broadcast %cst_5 : f32 to vector<8x256xf32>
    %8 = arith.maximumf %6, %7 : vector<8x256xf32>
    %9 = arith.truncf %8 : vector<8x256xf32> to vector<8x256xbf16>
    %c0_6 = arith.constant 0 : index
    %c0_7 = arith.constant 0 : index
    %10 = vector.load %arg5[%c0_6, %c0_7] : memref<8x256xbf16, #tpu.memory_space<vmem>>, vector<8x256xbf16>
    tpu.vector_store %arg5[%c0_6, %c0_7], %9 {strides = array<i32>} : memref<8x256xbf16, #tpu.memory_space<vmem>>, vector<8x256xbf16>,
    return
  }
  func.func @transform_0(%arg0: i32, %arg1: i32) -> (i32, i32) {
    %c0_i32 = arith.constant 0 : i32
    %c0_i32_0 = arith.constant 0 : i32
    return %arg1, %c0_i32 : i32, i32
  }
  func.func @transform_1(%arg0: i32, %arg1: i32) -> (i32, i32) {
    %c0_i32 = arith.constant 0 : i32
    %c0_i32_0 = arith.constant 0 : i32
    return %c0_i32, %arg0 : i32, i32
  }
  func.func @transform_2(%arg0: i32, %arg1: i32) -> (i32, i32) {
    %c0_i32 = arith.constant 0 : i32
    %c0_i32_0 = arith.constant 0 : i32
    return %c0_i32, %arg0 : i32, i32
  }
  func.func @transform_3(%arg0: i32, %arg1: i32) -> (i32, i32) {
    %c0_i32 = arith.constant 0 : i32
    return %arg1, %arg0 : i32, i32
  }
}

</mosaic_0001>

<llo_original>
// kernel: tpu_custom_call.1
$region0: #{tpu_custom_call.1}
  #allocation0 [shape = 'u32[]', space=smem, size = 0x4, offset = 0x4, fixed_abs, tag = 'smem constant byte address 0x4 - core index']
  #allocation1 [shape = 'u32[72,128]{1,0:T(1,128)}', space=vmem, size = 0x9000, scoped, tag = 'internal scratch']
  %s0 = inlined_call_operand.hbm [shape: f32[16,128], index: 0, kind: input, shape index: {}]
  %s1 = inlined_call_operand.hbm [shape: bf16[128,256], index: 1, kind: input, shape index: {}]
  %s2 = inlined_call_operand.hbm [shape: f32[1,256], index: 2, kind: input, shape index: {}]
  %s3 = inlined_call_operand.hbm [shape: bf16[16,256], index: 3, kind: output, shape index: {}]
  %s4 = sld [smem:[#allocation0]]
  $region57: #{tpu_custom_call.1} parent=0
    _
  %s6 = ssub.s32 1, %s4
  %s7 = scalar_select 0, %s6, %s4
  $region1: #{tpu_custom_call.1} parent=0
    #allocation2 [shape = 'u8[8192]{0}', space=vmem, size = 0x2000, scoped, tag = 'input window, operand 0']
    #allocation3 [shape = 's32[2]{0}', space=sflag, size = 0x8, scoped, tag = 'scoped memory for tpu_custom_call.1']
    #allocation4 [shape = 's32[2]{0}', space=sflag, size = 0x8, scoped, tag = 'scoped memory for tpu_custom_call.1']
    #allocation5 [shape = 'u8[65536]{0}', space=vmem, size = 0x10000, scoped, tag = 'input window, operand 1, single buffered']
    #allocation6 [shape = 's32[1]{0}', space=sflag, size = 0x4, scoped, tag = 'scoped memory for tpu_custom_call.1']
    #allocation7 [shape = 'u8[1024]{0}', space=vmem, size = 0x400, scoped, tag = 'input window, operand 2, single buffered']
    #allocation8 [shape = 'u8[8192]{0}', space=vmem, size = 0x2000, scoped, tag = 'output window, operand 0']
    %8 = vsyncpa [#allocation3], 0
    %s9 = scalar_lea.sflag [#allocation3], 1
    %10 = vsyncpa %s9, 0
    %11 = vsyncpa [#allocation6], 0
    %12 = vsyncpa [#allocation4], 0
    %s13 = scalar_lea.sflag [#allocation4], 1
    %14 = vsyncpa %s13, 0
    loop: start=0, step=1, limit=4
    $region2: #{tpu_custom_call.1} parent=1 // loop_pre_header
      _
    $region3: #{tpu_custom_call.1} parent=1 // loop_header
      %s16 = sphi 0, %s20
      %p17 = scmp.ge.s32.totalorder %s16, 4
      %s23 = sphi 0, %s35
      %s24 = sphi 0, %s31
      %s25 = sphi 0, %s23
      %s26 = sphi 0, %s24
      %s27 = sphi 0, %s25
      %s28 = sphi 0, %s26
      %s38 = sphi 0, %s40
      %s41 = sphi 0, %s38
      %s42 = sphi 0, %s41
      %s58 = sphi 0, %s42
      %s64 = sphi 0, %s66
      %s67 = sphi 0, %s64
      %s68 = sphi 0, %s67
      %s84 = sphi 0, %s68
      %s90 = sphi 0, %s92
      %s93 = sphi 0, %s90
      %s94 = sphi 0, %s93
      %s110 = sphi 0, %s94
      %s118 = sphi 0, %s120
      %s121 = sphi 0, %s118
      %s122 = sphi 0, %s121
      %s138 = sphi 0, %s122
    $region4: #{tpu_custom_call.1} parent=1 // loop_header_branch
      %19 = sbr.rel (%p17) target = $region8
    $region5: #{tpu_custom_call.1} parent=1 // loop_body
      %s21 = ssub.s32 %s16, 1
      %s22 = ssub.s32 %s16, 2
      %s29 = sadd.s32 1, %s24
      %p30 = scmp.ge.s32.totalorder %s29, 2
      %s31 = scalar_select %p30, 0, %s29
      %s32 = sadd.s32 1, %s23
      %s33 = scalar_select %p30, %s32, %s23
      %p34 = scmp.ge.s32.totalorder %s33, 1
      %s35 = scalar_select %p34, 0, %s33
      %s36 = ssub.s32 %s24, %s31
      %p37 = scmp.eq.s32.totalorder %s36, 0
      %s39 = sadd.s32 %s38, 1
      %s40 = scalar_select %p37, %s38, %s39
      %p43 = pneg %p37
      %p44 = scmp.eq.s32.totalorder %s16, 1
      %p45 = por %p43, %p44
      %p46 = scmp.ne.s32.totalorder %s38, %s41
      %p47 = scmp.eq.s32.totalorder %s16, 0
      %p48 = por %p46, %p47
      %p49 = scmp.ne.s32.totalorder %s38, %s41
      %p50 = scmp.eq.s32.totalorder %s21, 1
      %p51 = por %p49, %p50
      %p52 = scmp.ne.s32.totalorder %s41, %s42
      %p53 = scmp.eq.s32.totalorder %s21, 0
      %p54 = por %p52, %p53
      %p55 = scmp.ne.s32.totalorder %s41, %s42
      %p56 = scmp.eq.s32.totalorder %s22, 1
      %p57 = por %p55, %p56
      %p59 = scmp.ne.s32.totalorder %s42, %s58
      %p60 = scmp.eq.s32.totalorder %s22, 0
      %p61 = por %p59, %p60
      %s62 = ssub.s32 %s23, %s35
      %p63 = scmp.eq.s32.totalorder %s62, 0
      %s65 = sadd.s32 %s64, 1
      %s66 = scalar_select %p63, %s64, %s65
      %p69 = pneg %p63
      %p70 = scmp.eq.s32.totalorder %s16, 1
      %p71 = por %p69, %p70
      %p72 = scmp.ne.s32.totalorder %s64, %s67
      %p73 = scmp.eq.s32.totalorder %s16, 0
      %p74 = por %p72, %p73
      %p75 = scmp.ne.s32.totalorder %s64, %s67
      %p76 = scmp.eq.s32.totalorder %s21, 1
      %p77 = por %p75, %p76
      %p78 = scmp.ne.s32.totalorder %s67, %s68
      %p79 = scmp.eq.s32.totalorder %s21, 0
      %p80 = por %p78, %p79
      %p81 = scmp.ne.s32.totalorder %s67, %s68
      %p82 = scmp.eq.s32.totalorder %s22, 1
      %p83 = por %p81, %p82
      %p85 = scmp.ne.s32.totalorder %s68, %s84
      %p86 = scmp.eq.s32.totalorder %s22, 0
      %p87 = por %p85, %p86
      %s88 = ssub.s32 %s23, %s35
      %p89 = scmp.eq.s32.totalorder %s88, 0
      %s91 = sadd.s32 %s90, 1
      %s92 = scalar_select %p89, %s90, %s91
      %p95 = pneg %p89
      %p96 = scmp.eq.s32.totalorder %s16, 1
      %p97 = por %p95, %p96
      %p98 = scmp.ne.s32.totalorder %s90, %s93
      %p99 = scmp.eq.s32.totalorder %s16, 0
      %p100 = por %p98, %p99
      %p101 = scmp.ne.s32.totalorder %s90, %s93
      %p102 = scmp.eq.s32.totalorder %s21, 1
      %p103 = por %p101, %p102
      %p104 = scmp.ne.s32.totalorder %s93, %s94
      %p105 = scmp.eq.s32.totalorder %s21, 0
      %p106 = por %p104, %p105
      %p107 = scmp.ne.s32.totalorder %s93, %s94
      %p108 = scmp.eq.s32.totalorder %s22, 1
      %p109 = por %p107, %p108
      %p111 = scmp.ne.s32.totalorder %s94, %s110
      %p112 = scmp.eq.s32.totalorder %s22, 0
      %p113 = por %p111, %p112
      %s114 = ssub.s32 %s24, %s31
      %s115 = ssub.s32 %s23, %s35
      %s116 = sor.u32 %s114, %s115
      %p117 = scmp.eq.s32.totalorder %s116, 0
      %s119 = sadd.s32 %s118, 1
      %s120 = scalar_select %p117, %s118, %s119
      %p123 = pneg %p117
      %p124 = scmp.eq.s32.totalorder %s16, 1
      %p125 = por %p123, %p124
      %p126 = scmp.ne.s32.totalorder %s118, %s121
      %p127 = scmp.eq.s32.totalorder %s16, 0
      %p128 = por %p126, %p127
      %p129 = scmp.ne.s32.totalorder %s118, %s121
      %p130 = scmp.eq.s32.totalorder %s21, 1
      %p131 = por %p129, %p130
      %p132 = scmp.ne.s32.totalorder %s121, %s122
      %p133 = scmp.eq.s32.totalorder %s21, 0
      %p134 = por %p132, %p133
      %p135 = scmp.ne.s32.totalorder %s121, %s122
      %p136 = scmp.eq.s32.totalorder %s22, 1
      %p137 = por %p135, %p136
      %p139 = scmp.ne.s32.totalorder %s122, %s138
      %p140 = scmp.eq.s32.totalorder %s22, 0
      %p141 = por %p139, %p140
      %p142 = scmp.le.s32.totalorder 1, %s16
      %p143 = scmp.lt.s32.totalorder %s16, 3
      %p144 = pnand %p142, %p143
      %p145 = pneg %p144
      // Predicated region
      $region9: #{tpu_custom_call.1} parent=5 // pred_check
        _
      $region10: #{tpu_custom_call.1} parent=5 // pred_check_branch
        %147 = sbr.rel (%p144) target = $region12
      $region11: #{tpu_custom_call.1} parent=5 // pred_region
        %s148 = ssub.s32 %s16, 1
        // Predicated region
        $region13: #{tpu_custom_call.1} parent=11 // pred_check
          %p149 = pneg %p80
        $region14: #{tpu_custom_call.1} parent=11 // pred_check_branch
          %151 = sbr.rel (%p149) target = $region16
        $region15: #{tpu_custom_call.1} parent=11 // pred_region
          %s152 = smul.u32 2, %s25
          %154 = vsyncadd [#allocation6], 0
          %s155 = smul.addr %s152, 4
          %s156 = scalar_lea.hbm %s1, %s155
          %s157 = sshll.u32 %s156, 4
          %s158 = int_to_ptr.hbm [resolvable:$true] %s157
          %s159 = sshll.u32 [#allocation5], 4
          %s160 = int_to_ptr.vmem [resolvable:$true] %s159
          %165 = dma.hbm_to_vmem [thread:$0]  %s158, 2048, %s160, [#allocation6], 128, 128, 8
        $region16: #{tpu_custom_call.1} parent=11 // pred_fallthru
          _
        // Predicated region
        $region17: #{tpu_custom_call.1} parent=11 // pred_check
          %p166 = pneg %p106
        $region18: #{tpu_custom_call.1} parent=11 // pred_check_branch
          %168 = sbr.rel (%p166) target = $region20
        $region19: #{tpu_custom_call.1} parent=11 // pred_region
          %s169 = smul.u32 2, %s25
          %171 = vsyncadd [#allocation6], 0
          %s172 = scalar_lea.hbm %s2, %s169
          %s174 = sshll.u32 %s172, 4
          %s175 = int_to_ptr.hbm [resolvable:$true] %s174
          %s176 = sshll.u32 [#allocation7], 4
          %s177 = int_to_ptr.vmem [resolvable:$true] %s176
          %179 = dma.hbm_to_vmem [thread:$0]  %s175, 32, %s177, [#allocation6]
        $region20: #{tpu_custom_call.1} parent=11 // pred_fallthru
          _
      $region12: #{tpu_custom_call.1} parent=5 // pred_fallthru
        _
      %p180 = scmp.lt.s32.totalorder %s16, 2
      // Predicated region
      $region21: #{tpu_custom_call.1} parent=5 // pred_check
        %p181 = pneg %p180
      $region22: #{tpu_custom_call.1} parent=5 // pred_check_branch
        %183 = sbr.rel (%p181) target = $region24
      $region23: #{tpu_custom_call.1} parent=5 // pred_region
        // Predicated region
        $region25: #{tpu_custom_call.1} parent=23 // pred_check
          %p184 = pneg %p48
        $region26: #{tpu_custom_call.1} parent=23 // pred_check_branch
          %186 = sbr.rel (%p184) target = $region28
        $region27: #{tpu_custom_call.1} parent=23 // pred_region
          %s187 = sand.u32 %s38, 1
          %s188 = scalar_lea.sflag [#allocation3], %s187
          %s189 = sand.u32 %s38, 1
          %s190 = smul.addr %s189, 8
          %s191 = scalar_lea.vmem [#allocation2], %s190
          %193 = vsyncadd %s188, 0
          %s194 = smul.addr %s24, 8
          %s195 = scalar_lea.hbm %s0, %s194
          %s197 = sshll.u32 %s195, 4
          %s198 = int_to_ptr.hbm [resolvable:$true] %s197
          %s199 = sshll.u32 %s191, 4
          %s200 = int_to_ptr.vmem [resolvable:$true] %s199
          %202 = dma.hbm_to_vmem [thread:$0]  %s198, 128, %s200, %s188
        $region28: #{tpu_custom_call.1} parent=23 // pred_fallthru
          _
      $region24: #{tpu_custom_call.1} parent=5 // pred_fallthru
        _
      %p203 = scmp.le.s32.totalorder 1, %s16
      %p204 = scmp.lt.s32.totalorder %s16, 3
      %p205 = pnand %p203, %p204
      %p206 = pneg %p205
      // Predicated region
      $region29: #{tpu_custom_call.1} parent=5 // pred_check
        _
      $region30: #{tpu_custom_call.1} parent=5 // pred_check_branch
        %208 = sbr.rel (%p205) target = $region32
      $region31: #{tpu_custom_call.1} parent=5 // pred_region
        %s209 = ssub.s32 %s16, 1
        %s210 = sand.u32 %s41, 1
        %s211 = scalar_lea.sflag [#allocation3], %s210
        %s212 = sand.u32 %s41, 1
        %s213 = smul.addr %s212, 8
        %s214 = scalar_lea.vmem [#allocation2], %s213
        // Predicated region
        $region33: #{tpu_custom_call.1} parent=31 // pred_check
          %p215 = pneg %p54
        $region34: #{tpu_custom_call.1} parent=31 // pred_check_branch
          %217 = sbr.rel (%p215) target = $region36
        $region35: #{tpu_custom_call.1} parent=31 // pred_region
          %219 = dma.done %s211, 128
        $region36: #{tpu_custom_call.1} parent=31 // pred_fallthru
          _
        // Predicated region
        $region37: #{tpu_custom_call.1} parent=31 // pred_check
          %p220 = pneg %p80
        $region38: #{tpu_custom_call.1} parent=31 // pred_check_branch
          %222 = sbr.rel (%p220) target = $region40
        $region39: #{tpu_custom_call.1} parent=31 // pred_region
          %224 = dma.done [#allocation6], 2048
        $region40: #{tpu_custom_call.1} parent=31 // pred_fallthru
          _
        // Predicated region
        $region41: #{tpu_custom_call.1} parent=31 // pred_check
          %p225 = pneg %p106
        $region42: #{tpu_custom_call.1} parent=31 // pred_check_branch
          %227 = sbr.rel (%p225) target = $region44
        $region43: #{tpu_custom_call.1} parent=31 // pred_region
          %229 = dma.done [#allocation6], 32
        $region44: #{tpu_custom_call.1} parent=31 // pred_fallthru
          _
        %s230 = sand.u32 %s41, 1
        %s231 = scalar_lea.sflag [#allocation3], %s230
        %s232 = sand.u32 %s41, 1
        %s233 = smul.addr %s232, 8
        %s234 = scalar_lea.vmem [#allocation2], %s233
        %p235 = pneg %p54
        %p236 = pneg %p51
        %p237 = pneg %p80
        %p238 = pneg %p77
        %p239 = pneg %p106
        %p240 = pneg %p103
        %p241 = pneg %p134
        %p242 = pneg %p131
        %s243 = sand.u32 %s121, 1
        %s244 = scalar_lea.sflag [#allocation4], %s243
        %s245 = sand.u32 %s121, 1
        %s246 = smul.addr %s245, 8
        %s247 = scalar_lea.vmem [#allocation8], %s246
        %s248 = smul.u32 2, %s25
        %s249 = smul.u32 2, %s25
        %s250 = smul.u32 2, %s25
        %v251 = vld [vmem:[%s214] sm:$0xff]
        %v252 = vpack.c.bf16 %v251, %v251
        %v253 = vld [vmem:[#allocation5] sm:$0xff]
        %v254 = vld [vmem:[#allocation5 + $0x8] sm:$0xff]
        %v255 = vld [vmem:[#allocation5 + $0x10] sm:$0xff]
        %v256 = vld [vmem:[#allocation5 + $0x18] sm:$0xff]
        %v257 = vld [vmem:[#allocation5 + $0x20] sm:$0xff]
        %v258 = vld [vmem:[#allocation5 + $0x28] sm:$0xff]
        %v259 = vld [vmem:[#allocation5 + $0x30] sm:$0xff]
        %v260 = vld [vmem:[#allocation5 + $0x38] sm:$0xff]
        %v261 = vld [vmem:[#allocation5 + $0x40] sm:$0xff]
        %v262 = vld [vmem:[#allocation5 + $0x48] sm:$0xff]
        %v263 = vld [vmem:[#allocation5 + $0x50] sm:$0xff]
        %v264 = vld [vmem:[#allocation5 + $0x58] sm:$0xff]
        %v265 = vld [vmem:[#allocation5 + $0x60] sm:$0xff]
        %v266 = vld [vmem:[#allocation5 + $0x68] sm:$0xff]
        %v267 = vld [vmem:[#allocation5 + $0x70] sm:$0xff]
        %v268 = vld [vmem:[#allocation5 + $0x78] sm:$0xff]
        %v269 = vld [vmem:[#allocation7] sm:$0x3]
        %v271 = vperm.slane %v269, 0
        %v272 = vperm.slane %v269, 1
        %v291 = vunpack.c.l.b16 %v253
        %v292 = vunpack.c.h.b16 %v253
        %v293 = vunpack.c.l.b16 %v254
        %v294 = vunpack.c.h.b16 %v254
        %v295 = vunpack.c.l.b16 %v255
        %v296 = vunpack.c.h.b16 %v255
        %v297 = vunpack.c.l.b16 %v256
        %v298 = vunpack.c.h.b16 %v256
        %v299 = vunpack.c.l.b16 %v257
        %v300 = vunpack.c.h.b16 %v257
        %v301 = vunpack.c.l.b16 %v258
        %v302 = vunpack.c.h.b16 %v258
        %v303 = vunpack.c.l.b16 %v259
        %v304 = vunpack.c.h.b16 %v259
        %v305 = vunpack.c.l.b16 %v260
        %v306 = vunpack.c.h.b16 %v260
        %v307 = vunpack.c.l.b16 %v261
        %v308 = vunpack.c.h.b16 %v261
        %v309 = vunpack.c.l.b16 %v262
        %v310 = vunpack.c.h.b16 %v262
        %v311 = vunpack.c.l.b16 %v263
        %v312 = vunpack.c.h.b16 %v263
        %v313 = vunpack.c.l.b16 %v264
        %v314 = vunpack.c.h.b16 %v264
        %v315 = vunpack.c.l.b16 %v265
        %v316 = vunpack.c.h.b16 %v265
        %v317 = vunpack.c.l.b16 %v266
        %v318 = vunpack.c.h.b16 %v266
        %v319 = vunpack.c.l.b16 %v267
        %v320 = vunpack.c.h.b16 %v267
        %v321 = vunpack.c.l.b16 %v268
        %v322 = vunpack.c.h.b16 %v268
        %v323 = vpack.c.b16 %v293, %v291
        %v324 = vpack.c.b16 %v294, %v292
        %v325 = vpack.c.b16 %v297, %v295
        %v326 = vpack.c.b16 %v298, %v296
        %v327 = vpack.c.b16 %v301, %v299
        %v328 = vpack.c.b16 %v302, %v300
        %v329 = vpack.c.b16 %v305, %v303
        %v330 = vpack.c.b16 %v306, %v304
        %v331 = vpack.c.b16 %v309, %v307
        %v332 = vpack.c.b16 %v310, %v308
        %v333 = vpack.c.b16 %v313, %v311
        %v334 = vpack.c.b16 %v314, %v312
        %v335 = vpack.c.b16 %v317, %v315
        %v336 = vpack.c.b16 %v318, %v316
        %v337 = vpack.c.b16 %v321, %v319
        %v338 = vpack.c.b16 %v322, %v320
        %355 = vmatpush.bf16.msra.mxu0 %v337
        %356 = vmatpush.bf16.msra.mxu0 %v335
        %357 = vmatpush.bf16.msra.mxu0 %v333
        %358 = vmatpush.bf16.msra.mxu0 %v331
        %359 = vmatpush.bf16.msra.mxu0 %v329
        %360 = vmatpush.bf16.msra.mxu0 %v327
        %361 = vmatpush.bf16.msra.mxu0 %v325
        %362 = vmatpush.bf16.msra.mxu0 %v323
        %363 = vmatmul.bf16.gmra.mxu0 %v252
        %v364 = vpop.f32.mrf.mxu0
        %v365 = vadd.f32 %v271, %v364
        %v366 = vpop.f32.mrf.mxu0
        %367 = vdwg.mxu0
        %368 = vmatpush.bf16.msra.mxu0 %v338
        %369 = vmatpush.bf16.msra.mxu0 %v336
        %370 = vmatpush.bf16.msra.mxu0 %v334
        %371 = vmatpush.bf16.msra.mxu0 %v332
        %372 = vmatpush.bf16.msra.mxu0 %v330
        %373 = vmatpush.bf16.msra.mxu0 %v328
        %374 = vmatpush.bf16.msra.mxu0 %v326
        %375 = vmatpush.bf16.msra.mxu0 %v324
        %376 = vmatmul.bf16.gmra.mxu0 %v252
        %v377 = vpop.f32.mrf.mxu0
        %v378 = vadd.f32 %v272, %v377
        %v379 = vpop.f32.mrf.mxu0
        %380 = vdwg.mxu0
        %v381 = vmax.f32 %v365, 0.0
        %v382 = vmax.f32 %v378, 0.0
        %v383 = vpack.c.bf16 %v382, %v381
        %384 = vst [vmem:[%s247] sm:$0xff] %v383
        %s385 = sand.u32 %s121, 1
        %s386 = scalar_lea.sflag [#allocation4], %s385
        %s387 = sand.u32 %s121, 1
        %s388 = smul.addr %s387, 8
        %s389 = scalar_lea.vmem [#allocation8], %s388
        // Predicated region
        $region45: #{tpu_custom_call.1} parent=31 // pred_check
          %p390 = pneg %p131
        $region46: #{tpu_custom_call.1} parent=31 // pred_check_branch
          %392 = sbr.rel (%p390) target = $region48
        $region47: #{tpu_custom_call.1} parent=31 // pred_region
          %s393 = smul.u32 2, %s25
          %395 = vsyncadd %s386, 0
          %s396 = smul.addr %s26, 2
          %s397 = sadd.s32 %s393, %s396
          %s398 = smul.addr %s397, 4
          %s399 = scalar_lea.hbm %s3, %s398
          %s401 = sshll.u32 %s389, 4
          %s402 = int_to_ptr.vmem [resolvable:$true] %s401
          %s403 = sshll.u32 %s399, 4
          %s404 = int_to_ptr.hbm [resolvable:$true] %s403
          %406 = dma.vmem_to_hbm [thread:$0]  %s402, 128, %s404, %s386
        $region48: #{tpu_custom_call.1} parent=31 // pred_fallthru
          _
      $region32: #{tpu_custom_call.1} parent=5 // pred_fallthru
        _
      %p407 = scmp.le.s32.totalorder 2, %s16
      // Predicated region
      $region49: #{tpu_custom_call.1} parent=5 // pred_check
        %p408 = pneg %p407
      $region50: #{tpu_custom_call.1} parent=5 // pred_check_branch
        %410 = sbr.rel (%p408) target = $region52
      $region51: #{tpu_custom_call.1} parent=5 // pred_region
        %s411 = ssub.s32 %s16, 2
        // Predicated region
        $region53: #{tpu_custom_call.1} parent=51 // pred_check
          %p412 = pneg %p137
        $region54: #{tpu_custom_call.1} parent=51 // pred_check_branch
          %414 = sbr.rel (%p412) target = $region56
        $region55: #{tpu_custom_call.1} parent=51 // pred_region
          %s415 = sand.u32 %s122, 1
          %s416 = scalar_lea.sflag [#allocation4], %s415
          %s417 = sand.u32 %s122, 1
          %s418 = smul.addr %s417, 8
          %s419 = scalar_lea.vmem [#allocation8], %s418
          %421 = dma.done %s416, 128
        $region56: #{tpu_custom_call.1} parent=51 // pred_fallthru
          _
      $region52: #{tpu_custom_call.1} parent=5 // pred_fallthru
        _
    $region6: #{tpu_custom_call.1} parent=1 // loop_footer
      %s20 = sadd.s32 1, %s16
    $region7: #{tpu_custom_call.1} parent=1 // loop_footer_branch
      %15 = sbr.rel target = $region3
    $region8: #{tpu_custom_call.1} parent=1 // loop_exit
      _
    %422 = vsyncpa [#allocation3], 1
    %s423 = scalar_lea.sflag [#allocation3], 1
    %424 = vsyncpa %s423, 1
    %425 = vsyncpa [#allocation6], 1
    %426 = vsyncpa [#allocation4], 1
    %s427 = scalar_lea.sflag [#allocation4], 1
    %428 = vsyncpa %s427, 1

// kernel: tpu_custom_call.1
$region0: #{tpu_custom_call.1}
  #allocation0 [shape = 'u32[]', space=smem, size = 0x4, offset = 0x4, fixed_abs, tag = 'smem constant byte address 0x4 - core index']
  #allocation1 [shape = 'u32[72,128]{1,0:T(1,128)}', space=vmem, size = 0x9000, scoped, tag = 'internal scratch']
  %s0 = inlined_call_operand.hbm [shape: f32[16,128], index: 0, kind: input, shape index: {}]
  %s1 = inlined_call_operand.hbm [shape: bf16[128,256], index: 1, kind: input, shape index: {}]
  %s2 = inlined_call_operand.hbm [shape: f32[1,256], index: 2, kind: input, shape index: {}]
  %s3 = inlined_call_operand.hbm [shape: bf16[16,256], index: 3, kind: output, shape index: {}]
  %s4 = sld [smem:[#allocation0]]
  $region57: #{tpu_custom_call.1} parent=0
    _
  %s6 = ssub.s32 1, %s4
  %s7 = scalar_select 0, %s6, %s4
  $region1: #{tpu_custom_call.1} parent=0
    #allocation2 [shape = 'u8[8192]{0}', space=vmem, size = 0x2000, scoped, tag = 'input window, operand 0']
    #allocation3 [shape = 's32[2]{0}', space=sflag, size = 0x8, scoped, tag = 'scoped memory for tpu_custom_call.1']
    #allocation4 [shape = 's32[2]{0}', space=sflag, size = 0x8, scoped, tag = 'scoped memory for tpu_custom_call.1']
    #allocation5 [shape = 'u8[65536]{0}', space=vmem, size = 0x10000, scoped, tag = 'input window, operand 1, single buffered']
    #allocation6 [shape = 's32[1]{0}', space=sflag, size = 0x4, scoped, tag = 'scoped memory for tpu_custom_call.1']
    #allocation7 [shape = 'u8[1024]{0}', space=vmem, size = 0x400, scoped, tag = 'input window, operand 2, single buffered']
    #allocation8 [shape = 'u8[8192]{0}', space=vmem, size = 0x2000, scoped, tag = 'output window, operand 0']
    %8 = vsyncpa [#allocation3], 0
    %s9 = scalar_lea.sflag [#allocation3], 1
    %10 = vsyncpa %s9, 0
    %11 = vsyncpa [#allocation6], 0
    %12 = vsyncpa [#allocation4], 0
    %s13 = scalar_lea.sflag [#allocation4], 1
    %14 = vsyncpa %s13, 0
    loop: start=0, step=1, limit=4
    $region2: #{tpu_custom_call.1} parent=1 // loop_pre_header
      _
    $region3: #{tpu_custom_call.1} parent=1 // loop_header
      %s16 = sphi 0, %s20
      %p17 = scmp.ge.s32.totalorder %s16, 4
      %s23 = sphi 0, %s35
      %s24 = sphi 0, %s31
      %s25 = sphi 0, %s23
      %s26 = sphi 0, %s24
      %s27 = sphi 0, %s25
      %s28 = sphi 0, %s26
      %s38 = sphi 0, %s40
      %s41 = sphi 0, %s38
      %s42 = sphi 0, %s41
      %s58 = sphi 0, %s42
      %s64 = sphi 0, %s66
      %s67 = sphi 0, %s64
      %s68 = sphi 0, %s67
      %s84 = sphi 0, %s68
      %s90 = sphi 0, %s92
      %s93 = sphi 0, %s90
      %s94 = sphi 0, %s93
      %s110 = sphi 0, %s94
      %s118 = sphi 0, %s120
      %s121 = sphi 0, %s118
      %s122 = sphi 0, %s121
      %s138 = sphi 0, %s122
    $region4: #{tpu_custom_call.1} parent=1 // loop_header_branch
      %19 = sbr.rel (%p17) target = $region8
    $region5: #{tpu_custom_call.1} parent=1 // loop_body
      %s21 = ssub.s32 %s16, 1
      %s22 = ssub.s32 %s16, 2
      %s29 = sadd.s32 1, %s24
      %p30 = scmp.ge.s32.totalorder %s29, 2
      %s31 = scalar_select %p30, 0, %s29
      %s32 = sadd.s32 1, %s23
      %s33 = scalar_select %p30, %s32, %s23
      %p34 = scmp.ge.s32.totalorder %s33, 1
      %s35 = scalar_select %p34, 0, %s33
      %s36 = ssub.s32 %s24, %s31
      %p37 = scmp.eq.s32.totalorder %s36, 0
      %s39 = sadd.s32 %s38, 1
      %s40 = scalar_select %p37, %s38, %s39
      %p43 = pneg %p37
      %p44 = scmp.eq.s32.totalorder %s16, 1
      %p45 = por %p43, %p44
      %p46 = scmp.ne.s32.totalorder %s38, %s41
      %p47 = scmp.eq.s32.totalorder %s16, 0
      %p48 = por %p46, %p47
      %p49 = scmp.ne.s32.totalorder %s38, %s41
      %p50 = scmp.eq.s32.totalorder %s21, 1
      %p51 = por %p49, %p50
      %p52 = scmp.ne.s32.totalorder %s41, %s42
      %p53 = scmp.eq.s32.totalorder %s21, 0
      %p54 = por %p52, %p53
      %p55 = scmp.ne.s32.totalorder %s41, %s42
      %p56 = scmp.eq.s32.totalorder %s22, 1
      %p57 = por %p55, %p56
      %p59 = scmp.ne.s32.totalorder %s42, %s58
      %p60 = scmp.eq.s32.totalorder %s22, 0
      %p61 = por %p59, %p60
      %s62 = ssub.s32 %s23, %s35
      %p63 = scmp.eq.s32.totalorder %s62, 0
      %s65 = sadd.s32 %s64, 1
      %s66 = scalar_select %p63, %s64, %s65
      %p69 = pneg %p63
      %p70 = scmp.eq.s32.totalorder %s16, 1
      %p71 = por %p69, %p70
      %p72 = scmp.ne.s32.totalorder %s64, %s67
      %p73 = scmp.eq.s32.totalorder %s16, 0
      %p74 = por %p72, %p73
      %p75 = scmp.ne.s32.totalorder %s64, %s67
      %p76 = scmp.eq.s32.totalorder %s21, 1
      %p77 = por %p75, %p76
      %p78 = scmp.ne.s32.totalorder %s67, %s68
      %p79 = scmp.eq.s32.totalorder %s21, 0
      %p80 = por %p78, %p79
      %p81 = scmp.ne.s32.totalorder %s67, %s68
      %p82 = scmp.eq.s32.totalorder %s22, 1
      %p83 = por %p81, %p82
      %p85 = scmp.ne.s32.totalorder %s68, %s84
      %p86 = scmp.eq.s32.totalorder %s22, 0
      %p87 = por %p85, %p86
      %s88 = ssub.s32 %s23, %s35
      %p89 = scmp.eq.s32.totalorder %s88, 0
      %s91 = sadd.s32 %s90, 1
      %s92 = scalar_select %p89, %s90, %s91
      %p95 = pneg %p89
      %p96 = scmp.eq.s32.totalorder %s16, 1
      %p97 = por %p95, %p96
      %p98 = scmp.ne.s32.totalorder %s90, %s93
      %p99 = scmp.eq.s32.totalorder %s16, 0
      %p100 = por %p98, %p99
      %p101 = scmp.ne.s32.totalorder %s90, %s93
      %p102 = scmp.eq.s32.totalorder %s21, 1
      %p103 = por %p101, %p102
      %p104 = scmp.ne.s32.totalorder %s93, %s94
      %p105 = scmp.eq.s32.totalorder %s21, 0
      %p106 = por %p104, %p105
      %p107 = scmp.ne.s32.totalorder %s93, %s94
      %p108 = scmp.eq.s32.totalorder %s22, 1
      %p109 = por %p107, %p108
      %p111 = scmp.ne.s32.totalorder %s94, %s110
      %p112 = scmp.eq.s32.totalorder %s22, 0
      %p113 = por %p111, %p112
      %s114 = ssub.s32 %s24, %s31
      %s115 = ssub.s32 %s23, %s35
      %s116 = sor.u32 %s114, %s115
      %p117 = scmp.eq.s32.totalorder %s116, 0
      %s119 = sadd.s32 %s118, 1
      %s120 = scalar_select %p117, %s118, %s119
      %p123 = pneg %p117
      %p124 = scmp.eq.s32.totalorder %s16, 1
      %p125 = por %p123, %p124
      %p126 = scmp.ne.s32.totalorder %s118, %s121
      %p127 = scmp.eq.s32.totalorder %s16, 0
      %p128 = por %p126, %p127
      %p129 = scmp.ne.s32.totalorder %s118, %s121
      %p130 = scmp.eq.s32.totalorder %s21, 1
      %p131 = por %p129, %p130
      %p132 = scmp.ne.s32.totalorder %s121, %s122
      %p133 = scmp.eq.s32.totalorder %s21, 0
      %p134 = por %p132, %p133
      %p135 = scmp.ne.s32.totalorder %s121, %s122
      %p136 = scmp.eq.s32.totalorder %s22, 1
      %p137 = por %p135, %p136
      %p139 = scmp.ne.s32.totalorder %s122, %s138
      %p140 = scmp.eq.s32.totalorder %s22, 0
      %p141 = por %p139, %p140
      %p142 = scmp.le.s32.totalorder 1, %s16
      %p143 = scmp.lt.s32.totalorder %s16, 3
      %p144 = pnand %p142, %p143
      %p145 = pneg %p144
      // Predicated region
      $region9: #{tpu_custom_call.1} parent=5 // pred_check
        _
      $region10: #{tpu_custom_call.1} parent=5 // pred_check_branch
        %147 = sbr.rel (%p144) target = $region12
      $region11: #{tpu_custom_call.1} parent=5 // pred_region
        %s148 = ssub.s32 %s16, 1
        // Predicated region
        $region13: #{tpu_custom_call.1} parent=11 // pred_check
          %p149 = pneg %p80
        $region14: #{tpu_custom_call.1} parent=11 // pred_check_branch
          %151 = sbr.rel (%p149) target = $region16
        $region15: #{tpu_custom_call.1} parent=11 // pred_region
          %s152 = smul.u32 2, %s25
          %154 = vsyncadd [#allocation6], 0
          %s155 = smul.addr %s152, 4
          %s156 = scalar_lea.hbm %s1, %s155
          %s157 = sshll.u32 %s156, 4
          %s158 = int_to_ptr.hbm [resolvable:$true] %s157
          %s159 = sshll.u32 [#allocation5], 4
          %s160 = int_to_ptr.vmem [resolvable:$true] %s159
          %165 = dma.hbm_to_vmem [thread:$0]  %s158, 2048, %s160, [#allocation6], 128, 128, 8
        $region16: #{tpu_custom_call.1} parent=11 // pred_fallthru
          _
        // Predicated region
        $region17: #{tpu_custom_call.1} parent=11 // pred_check
          %p166 = pneg %p106
        $region18: #{tpu_custom_call.1} parent=11 // pred_check_branch
          %168 = sbr.rel (%p166) target = $region20
        $region19: #{tpu_custom_call.1} parent=11 // pred_region
          %s169 = smul.u32 2, %s25
          %171 = vsyncadd [#allocation6], 0
          %s172 = scalar_lea.hbm %s2, %s169
          %s174 = sshll.u32 %s172, 4
          %s175 = int_to_ptr.hbm [resolvable:$true] %s174
          %s176 = sshll.u32 [#allocation7], 4
          %s177 = int_to_ptr.vmem [resolvable:$true] %s176
          %179 = dma.hbm_to_vmem [thread:$0]  %s175, 32, %s177, [#allocation6]
        $region20: #{tpu_custom_call.1} parent=11 // pred_fallthru
          _
      $region12: #{tpu_custom_call.1} parent=5 // pred_fallthru
        _
      %p180 = scmp.lt.s32.totalorder %s16, 2
      // Predicated region
      $region21: #{tpu_custom_call.1} parent=5 // pred_check
        %p181 = pneg %p180
      $region22: #{tpu_custom_call.1} parent=5 // pred_check_branch
        %183 = sbr.rel (%p181) target = $region24
      $region23: #{tpu_custom_call.1} parent=5 // pred_region
        // Predicated region
        $region25: #{tpu_custom_call.1} parent=23 // pred_check
          %p184 = pneg %p48
        $region26: #{tpu_custom_call.1} parent=23 // pred_check_branch
          %186 = sbr.rel (%p184) target = $region28
        $region27: #{tpu_custom_call.1} parent=23 // pred_region
          %s187 = sand.u32 %s38, 1
          %s188 = scalar_lea.sflag [#allocation3], %s187
          %s189 = sand.u32 %s38, 1
          %s190 = smul.addr %s189, 8
          %s191 = scalar_lea.vmem [#allocation2], %s190
          %193 = vsyncadd %s188, 0
          %s194 = smul.addr %s24, 8
          %s195 = scalar_lea.hbm %s0, %s194
          %s197 = sshll.u32 %s195, 4
          %s198 = int_to_ptr.hbm [resolvable:$true] %s197
          %s199 = sshll.u32 %s191, 4
          %s200 = int_to_ptr.vmem [resolvable:$true] %s199
          %202 = dma.hbm_to_vmem [thread:$0]  %s198, 128, %s200, %s188
        $region28: #{tpu_custom_call.1} parent=23 // pred_fallthru
          _
      $region24: #{tpu_custom_call.1} parent=5 // pred_fallthru
        _
      %p203 = scmp.le.s32.totalorder 1, %s16
      %p204 = scmp.lt.s32.totalorder %s16, 3
      %p205 = pnand %p203, %p204
      %p206 = pneg %p205
      // Predicated region
      $region29: #{tpu_custom_call.1} parent=5 // pred_check
        _
      $region30: #{tpu_custom_call.1} parent=5 // pred_check_branch
        %208 = sbr.rel (%p205) target = $region32
      $region31: #{tpu_custom_call.1} parent=5 // pred_region
        %s209 = ssub.s32 %s16, 1
        %s210 = sand.u32 %s41, 1
        %s211 = scalar_lea.sflag [#allocation3], %s210
        %s212 = sand.u32 %s41, 1
        %s213 = smul.addr %s212, 8
        %s214 = scalar_lea.vmem [#allocation2], %s213
        // Predicated region
        $region33: #{tpu_custom_call.1} parent=31 // pred_check
          %p215 = pneg %p54
        $region34: #{tpu_custom_call.1} parent=31 // pred_check_branch
          %217 = sbr.rel (%p215) target = $region36
        $region35: #{tpu_custom_call.1} parent=31 // pred_region
          %219 = dma.done %s211, 128
        $region36: #{tpu_custom_call.1} parent=31 // pred_fallthru
          _
        // Predicated region
        $region37: #{tpu_custom_call.1} parent=31 // pred_check
          %p220 = pneg %p80
        $region38: #{tpu_custom_call.1} parent=31 // pred_check_branch
          %222 = sbr.rel (%p220) target = $region40
        $region39: #{tpu_custom_call.1} parent=31 // pred_region
          %224 = dma.done [#allocation6], 2048
        $region40: #{tpu_custom_call.1} parent=31 // pred_fallthru
          _
        // Predicated region
        $region41: #{tpu_custom_call.1} parent=31 // pred_check
          %p225 = pneg %p106
        $region42: #{tpu_custom_call.1} parent=31 // pred_check_branch
          %227 = sbr.rel (%p225) target = $region44
        $region43: #{tpu_custom_call.1} parent=31 // pred_region
          %229 = dma.done [#allocation6], 32
        $region44: #{tpu_custom_call.1} parent=31 // pred_fallthru
          _
        %s230 = sand.u32 %s41, 1
        %s231 = scalar_lea.sflag [#allocation3], %s230
        %s232 = sand.u32 %s41, 1
        %s233 = smul.addr %s232, 8
        %s234 = scalar_lea.vmem [#allocation2], %s233
        %p235 = pneg %p54
        %p236 = pneg %p51
        %p237 = pneg %p80
        %p238 = pneg %p77
        %p239 = pneg %p106
        %p240 = pneg %p103
        %p241 = pneg %p134
        %p242 = pneg %p131
        %s243 = sand.u32 %s121, 1
        %s244 = scalar_lea.sflag [#allocation4], %s243
        %s245 = sand.u32 %s121, 1
        %s246 = smul.addr %s245, 8
        %s247 = scalar_lea.vmem [#allocation8], %s246
        %s248 = smul.u32 2, %s25
        %s249 = smul.u32 2, %s25
        %s250 = smul.u32 2, %s25
        %v251 = vld [vmem:[%s214] sm:$0xff]
        %v252 = vpack.c.bf16 %v251, %v251
        %v253 = vld [vmem:[#allocation5] sm:$0xff]
        %v254 = vld [vmem:[#allocation5 + $0x8] sm:$0xff]
        %v255 = vld [vmem:[#allocation5 + $0x10] sm:$0xff]
        %v256 = vld [vmem:[#allocation5 + $0x18] sm:$0xff]
        %v257 = vld [vmem:[#allocation5 + $0x20] sm:$0xff]
        %v258 = vld [vmem:[#allocation5 + $0x28] sm:$0xff]
        %v259 = vld [vmem:[#allocation5 + $0x30] sm:$0xff]
        %v260 = vld [vmem:[#allocation5 + $0x38] sm:$0xff]
        %v261 = vld [vmem:[#allocation5 + $0x40] sm:$0xff]
        %v262 = vld [vmem:[#allocation5 + $0x48] sm:$0xff]
        %v263 = vld [vmem:[#allocation5 + $0x50] sm:$0xff]
        %v264 = vld [vmem:[#allocation5 + $0x58] sm:$0xff]
        %v265 = vld [vmem:[#allocation5 + $0x60] sm:$0xff]
        %v266 = vld [vmem:[#allocation5 + $0x68] sm:$0xff]
        %v267 = vld [vmem:[#allocation5 + $0x70] sm:$0xff]
        %v268 = vld [vmem:[#allocation5 + $0x78] sm:$0xff]
        %v269 = vld [vmem:[#allocation7] sm:$0x3]
        %v271 = vperm.slane %v269, 0
        %v272 = vperm.slane %v269, 1
        %v291 = vunpack.c.l.b16 %v253
        %v292 = vunpack.c.h.b16 %v253
        %v293 = vunpack.c.l.b16 %v254
        %v294 = vunpack.c.h.b16 %v254
        %v295 = vunpack.c.l.b16 %v255
        %v296 = vunpack.c.h.b16 %v255
        %v297 = vunpack.c.l.b16 %v256
        %v298 = vunpack.c.h.b16 %v256
        %v299 = vunpack.c.l.b16 %v257
        %v300 = vunpack.c.h.b16 %v257
        %v301 = vunpack.c.l.b16 %v258
        %v302 = vunpack.c.h.b16 %v258
        %v303 = vunpack.c.l.b16 %v259
        %v304 = vunpack.c.h.b16 %v259
        %v305 = vunpack.c.l.b16 %v260
        %v306 = vunpack.c.h.b16 %v260
        %v307 = vunpack.c.l.b16 %v261
        %v308 = vunpack.c.h.b16 %v261
        %v309 = vunpack.c.l.b16 %v262
        %v310 = vunpack.c.h.b16 %v262
        %v311 = vunpack.c.l.b16 %v263
        %v312 = vunpack.c.h.b16 %v263
        %v313 = vunpack.c.l.b16 %v264
        %v314 = vunpack.c.h.b16 %v264
        %v315 = vunpack.c.l.b16 %v265
        %v316 = vunpack.c.h.b16 %v265
        %v317 = vunpack.c.l.b16 %v266
        %v318 = vunpack.c.h.b16 %v266
        %v319 = vunpack.c.l.b16 %v267
        %v320 = vunpack.c.h.b16 %v267
        %v321 = vunpack.c.l.b16 %v268
        %v322 = vunpack.c.h.b16 %v268
        %v323 = vpack.c.b16 %v293, %v291
        %v324 = vpack.c.b16 %v294, %v292
        %v325 = vpack.c.b16 %v297, %v295
        %v326 = vpack.c.b16 %v298, %v296
        %v327 = vpack.c.b16 %v301, %v299
        %v328 = vpack.c.b16 %v302, %v300
        %v329 = vpack.c.b16 %v305, %v303
        %v330 = vpack.c.b16 %v306, %v304
        %v331 = vpack.c.b16 %v309, %v307
        %v332 = vpack.c.b16 %v310, %v308
        %v333 = vpack.c.b16 %v313, %v311
        %v334 = vpack.c.b16 %v314, %v312
        %v335 = vpack.c.b16 %v317, %v315
        %v336 = vpack.c.b16 %v318, %v316
        %v337 = vpack.c.b16 %v321, %v319
        %v338 = vpack.c.b16 %v322, %v320
        %355 = vmatpush.bf16.msra.mxu0 %v337
        %356 = vmatpush.bf16.msra.mxu0 %v335
        %357 = vmatpush.bf16.msra.mxu0 %v333
        %358 = vmatpush.bf16.msra.mxu0 %v331
        %359 = vmatpush.bf16.msra.mxu0 %v329
        %360 = vmatpush.bf16.msra.mxu0 %v327
        %361 = vmatpush.bf16.msra.mxu0 %v325
        %362 = vmatpush.bf16.msra.mxu0 %v323
        %363 = vmatmul.bf16.gmra.mxu0 %v252
        %v364 = vpop.f32.mrf.mxu0
        %v365 = vadd.f32 %v271, %v364
        %v366 = vpop.f32.mrf.mxu0
        %367 = vdwg.mxu0
        %368 = vmatpush.bf16.msra.mxu0 %v338
        %369 = vmatpush.bf16.msra.mxu0 %v336
        %370 = vmatpush.bf16.msra.mxu0 %v334
        %371 = vmatpush.bf16.msra.mxu0 %v332
        %372 = vmatpush.bf16.msra.mxu0 %v330
        %373 = vmatpush.bf16.msra.mxu0 %v328
        %374 = vmatpush.bf16.msra.mxu0 %v326
        %375 = vmatpush.bf16.msra.mxu0 %v324
        %376 = vmatmul.bf16.gmra.mxu0 %v252
        %v377 = vpop.f32.mrf.mxu0
        %v378 = vadd.f32 %v272, %v377
        %v379 = vpop.f32.mrf.mxu0
        %380 = vdwg.mxu0
        %v381 = vmax.f32 %v365, 0.0
        %v382 = vmax.f32 %v378, 0.0
        %v383 = vpack.c.bf16 %v382, %v381
        %384 = vst [vmem:[%s247] sm:$0xff] %v383
        %s385 = sand.u32 %s121, 1
        %s386 = scalar_lea.sflag [#allocation4], %s385
        %s387 = sand.u32 %s121, 1
        %s388 = smul.addr %s387, 8
        %s389 = scalar_lea.vmem [#allocation8], %s388
        // Predicated region
        $region45: #{tpu_custom_call.1} parent=31 // pred_check
          %p390 = pneg %p131
        $region46: #{tpu_custom_call.1} parent=31 // pred_check_branch
          %392 = sbr.rel (%p390) target = $region48
        $region47: #{tpu_custom_call.1} parent=31 // pred_region
          %s393 = smul.u32 2, %s25
          %395 = vsyncadd %s386, 0
          %s396 = smul.addr %s26, 2
          %s397 = sadd.s32 %s393, %s396
          %s398 = smul.addr %s397, 4
          %s399 = scalar_lea.hbm %s3, %s398
          %s401 = sshll.u32 %s389, 4
          %s402 = int_to_ptr.vmem [resolvable:$true] %s401
          %s403 = sshll.u32 %s399, 4
          %s404 = int_to_ptr.hbm [resolvable:$true] %s403
          %406 = dma.vmem_to_hbm [thread:$0]  %s402, 128, %s404, %s386
        $region48: #{tpu_custom_call.1} parent=31 // pred_fallthru
          _
      $region32: #{tpu_custom_call.1} parent=5 // pred_fallthru
        _
      %p407 = scmp.le.s32.totalorder 2, %s16
      // Predicated region
      $region49: #{tpu_custom_call.1} parent=5 // pred_check
        %p408 = pneg %p407
      $region50: #{tpu_custom_call.1} parent=5 // pred_check_branch
        %410 = sbr.rel (%p408) target = $region52
      $region51: #{tpu_custom_call.1} parent=5 // pred_region
        %s411 = ssub.s32 %s16, 2
        // Predicated region
        $region53: #{tpu_custom_call.1} parent=51 // pred_check
          %p412 = pneg %p137
        $region54: #{tpu_custom_call.1} parent=51 // pred_check_branch
          %414 = sbr.rel (%p412) target = $region56
        $region55: #{tpu_custom_call.1} parent=51 // pred_region
          %s415 = sand.u32 %s122, 1
          %s416 = scalar_lea.sflag [#allocation4], %s415
          %s417 = sand.u32 %s122, 1
          %s418 = smul.addr %s417, 8
          %s419 = scalar_lea.vmem [#allocation8], %s418
          %421 = dma.done %s416, 128
        $region56: #{tpu_custom_call.1} parent=51 // pred_fallthru
          _
      $region52: #{tpu_custom_call.1} parent=5 // pred_fallthru
        _
    $region6: #{tpu_custom_call.1} parent=1 // loop_footer
      %s20 = sadd.s32 1, %s16
    $region7: #{tpu_custom_call.1} parent=1 // loop_footer_branch
      %15 = sbr.rel target = $region3
    $region8: #{tpu_custom_call.1} parent=1 // loop_exit
      _
    %422 = vsyncpa [#allocation3], 1
    %s423 = scalar_lea.sflag [#allocation3], 1
    %424 = vsyncpa %s423, 1
    %425 = vsyncpa [#allocation6], 1
    %426 = vsyncpa [#allocation4], 1
    %s427 = scalar_lea.sflag [#allocation4], 1
    %428 = vsyncpa %s427, 1

</llo_original>
